<compile_context>
chip_gen: v5e
topology: v5e:2x2
jax: 0.10.0
libtpu: 0.0.40
codegen_flags: <defaults>
</compile_context>

<pallas_src>
import functools

import jax
import jax.numpy as jnp
from jax import lax
from jax.experimental import pallas as pl
from jax.experimental.pallas import tpu as pltpu


def head_kernel(x_ref, wqkv_ref, o_ref, *, head_size):
    """One grid step: a block of `Bb` batch elements.

    x_ref:    (Bb, T, C)  native dtype (no upcast before the MXU)
    wqkv_ref: (C, 3H)     fused [q | k | v]; q columns pre-scaled by 1/sqrt(H)
    o_ref:    (Bb, T, H)
    """
    bb, t, c = x_ref.shape
    h = head_size

    # Single fused projection: (Bb*T, C) @ (C, 3H), f32 accumulation on the MXU.
    x2d = x_ref[...].reshape(bb * t, c)
    qkv = jnp.dot(x2d, wqkv_ref[...],
                  preferred_element_type=jnp.float32).reshape(bb, t, 3 * h)
    q = qkv[:, :, 0 * h:1 * h]          # already carries the 1/sqrt(H) scale
    k = qkv[:, :, 1 * h:2 * h]
    v = qkv[:, :, 2 * h:3 * h]

    # scores = q @ k^T, contracting the H axes directly (no materialized
    # transpose of k, keeps the XLU slot free).
    scores = jnp.einsum('bqh,bkh->bqk', q, k,
                        preferred_element_type=jnp.float32)      # (Bb, T, T)

    # Causal (lower-triangular) mask. Large finite negative instead of -inf so
    # a fully-masked row (if this kernel is ever reused with padding masks)
    # cannot produce NaN.
    row = lax.broadcasted_iota(jnp.int32, (t, t), 0)
    col = lax.broadcasted_iota(jnp.int32, (t, t), 1)
    scores = jnp.where((col <= row)[None, :, :], scores, -1e30)

    # Numerically-stable softmax; denominator reciprocal goes to the EUP.
    m = jnp.max(scores, axis=-1, keepdims=True)
    e = jnp.exp(scores - m)
    w = e * pl.reciprocal(jnp.sum(e, axis=-1, keepdims=True), approx=True)

    out = jnp.einsum('bqk,bkh->bqh', w, v,
                     preferred_element_type=jnp.float32)          # (Bb, T, H)
    o_ref[...] = out.astype(o_ref.dtype)


def fuse_head_params(w_key, w_query, w_value, head_size):
    """One-time parameter prep (call at init time, not per forward).

    PyTorch nn.Linear weights are (H, C) with y = x @ W.T.  Fuse them into one
    (C, 3H) matrix laid out as [q | k | v], folding the 1/sqrt(head_size)
    attention scale into the q columns so the kernel never scales the (T, T)
    scores.
    """
    scale = 1.0 / (float(head_size) ** 0.5)
    wq = (w_query * scale).T            # (C, H)
    wk = w_key.T                        # (C, H)
    wv = w_value.T                      # (C, H)
    return jnp.concatenate([wq, wk, wv], axis=1)    # (C, 3H)


def head_forward(x, w_qkv, head_size, block_b=None):
    """x: (B, T, C); w_qkv: fused (C, 3H) projection from fuse_head_params."""
    B, T, C = x.shape
    H = head_size
    assert w_qkv.shape == (C, 3 * H), w_qkv.shape

    # Block several batch elements per grid step so the matmul M dimension is
    # reasonably full and per-grid-step overhead is amortized.
    if block_b is None:
        block_b = max(1, min(B, pl.cdiv(128, T)))
    while B % block_b != 0:             # keep the grid exact
        block_b -= 1
    grid = (B // block_b,)

    kernel = functools.partial(head_kernel, head_size=H)

    return pl.pallas_call(
        kernel,
        out_shape=jax.ShapeDtypeStruct((B, T, H), x.dtype),
        grid_spec=pltpu.PrefetchScalarGridSpec(
            num_scalar_prefetch=0,
            grid=grid,
            in_specs=[
                pl.BlockSpec((block_b, T, C), lambda b: (b, 0, 0)),
                pl.BlockSpec((C, 3 * H), lambda b: (0, 0)),
            ],
            out_specs=pl.BlockSpec((block_b, T, H), lambda b: (b, 0, 0)),
        ),
        compiler_params=pltpu.CompilerParams(
            dimension_semantics=("parallel",)),
    )(x, w_qkv)


def _reference(x, w_key, w_query, w_value, head_size):
    """Pure-JAX reference mirroring the PyTorch forward (eval mode)."""
    k = x @ w_key.T
    q = x @ w_query.T
    v = x @ w_value.T
    scores = jnp.einsum('bqh,bkh->bqk', q, k) / (head_size ** 0.5)
    t = x.shape[1]
    mask = jnp.tril(jnp.ones((t, t), dtype=bool))
    scores = jnp.where(mask[None], scores, -jnp.inf)
    w = jax.nn.softmax(scores, axis=-1)
    return jnp.einsum('bqk,bkh->bqh', w, v)


if __name__ == "__main__":
    # Module defaults: block_size=8, num_embeds=64, head_size=8
    B, T, C, H = 2, 8, 64, 8

    key = jax.random.PRNGKey(0)
    kx, kk, kq, kv = jax.random.split(key, 4)

    x = jax.random.normal(kx, (B, T, C), dtype=jnp.float32)
    # nn.Linear(num_embeds, head_size, bias=False).weight has shape (H, C)
    w_key = jax.random.normal(kk, (H, C), dtype=jnp.float32) * 0.1
    w_query = jax.random.normal(kq, (H, C), dtype=jnp.float32) * 0.1
    w_value = jax.random.normal(kv, (H, C), dtype=jnp.float32) * 0.1

    # One-time parameter fusion (would live at module-init time).
    w_qkv = fuse_head_params(w_key, w_query, w_value, head_size=H)

    out = jax.block_until_ready(head_forward(x, w_qkv, head_size=H))
    assert out.shape == (B, T, H), out.shape

    ref = _reference(x, w_key, w_query, w_value, H)
    assert jnp.allclose(out, ref, rtol=1e-2, atol=1e-2), float(
        jnp.max(jnp.abs(out - ref)))

    print("KERNEL_OK")
</pallas_src>

<mosaic_0001>
module attributes {stable_mosaic.version = 11 : i64} {
  func.func @head_kernel(%arg0: i32, %arg1: memref<2x8x64xf32, #tpu.memory_space<vmem>>, %arg2: memref<64x24xf32, #tpu.memory_space<vmem>>, %arg3: memref<2x8x8xf32, #tpu.memory_space<vmem>>) attributes {dimension_semantics = [#tpu.dimension_semantics<parallel>], iteration_bounds = array<i64: 1>, scalar_prefetch = 0 : i64, scratch_operands = 0 : i64, tpu.core_type = #tpu.core_type<tc>, window_params = [{transform_indices = @transform_0, window_bounds = array<i64: 2, 8, 64>}, {pipeline_mode = #tpu.pipeline_mode<synchronous>, transform_indices = @transform_1, window_bounds = array<i64: 64, 24>}, {transform_indices = @transform_2, window_bounds = array<i64: 2, 8, 8>}]} {
    %c0 = arith.constant 0 : index
    %c0_0 = arith.constant 0 : index
    %c0_1 = arith.constant 0 : index
    %0 = vector.load %arg1[%c0, %c0_0, %c0_1] : memref<2x8x64xf32, #tpu.memory_space<vmem>>, vector<2x8x64xf32>
    %1 = vector.shape_cast %0 : vector<2x8x64xf32> to vector<16x64xf32>
    %c0_2 = arith.constant 0 : index
    %c0_3 = arith.constant 0 : index
    %2 = vector.load %arg2[%c0_2, %c0_3] : memref<64x24xf32, #tpu.memory_space<vmem>>, vector<64x24xf32>
    %cst = arith.constant dense<0.000000e+00> : vector<16x24xf32>
    %3 = tpu.matmul %1, %2, %cst {dimension_numbers = #tpu.dot_dimension_numbers<[1], [0], [0], [1], [0, 0, 1, 1], [], []>} : vector<16x64xf32>, vector<64x24xf32>, vector<16x24xf32> -> vector<16x24xf32>
    %4 = vector.shape_cast %3 : vector<16x24xf32> to vector<2x8x24xf32>
    %5 = vector.extract_strided_slice %4 {offsets = [0, 0, 0], sizes = [2, 8, 8], strides = [1, 1, 1]} : vector<2x8x24xf32> to vector<2x8x8xf32>
    %6 = vector.extract_strided_slice %4 {offsets = [0, 0, 8], sizes = [2, 8, 8], strides = [1, 1, 1]} : vector<2x8x24xf32> to vector<2x8x8xf32>
    %7 = vector.extract_strided_slice %4 {offsets = [0, 0, 16], sizes = [2, 8, 8], strides = [1, 1, 1]} : vector<2x8x24xf32> to vector<2x8x8xf32>
    "tpu.trace_start"() <{level = 10 : i32, message = "bqh,bkh->bqk"}> : () -> ()
    %cst_4 = arith.constant dense<0.000000e+00> : vector<2x8x8xf32>
    %8 = tpu.matmul %5, %6, %cst_4 {dimension_numbers = #tpu.dot_dimension_numbers<[2], [2], [1], [1], [0, 0, 0, 1, 1, 1], [0], [0]>} : vector<2x8x8xf32>, vector<2x8x8xf32>, vector<2x8x8xf32> -> vector<2x8x8xf32>
    "tpu.trace_stop"() : () -> ()
    %9 = tpu.iota {dimensions = array<i32: 0>} : vector<8x8xi32>
    %10 = tpu.iota {dimensions = array<i32: 1>} : vector<8x8xi32>
    %11 = arith.cmpi sle, %10, %9 : vector<8x8xi32>
    %12 = vector.shape_cast %11 : vector<8x8xi1> to vector<1x8x8xi1>
    %cst_5 = arith.constant -1.000000e+30 : f32
    %13 = vector.shape_cast %12 : vector<1x8x8xi1> to vector<1x8x8xi1>
    %14 = vector.broadcast %13 : vector<1x8x8xi1> to vector<2x8x8xi1>
    %15 = vector.broadcast %cst_5 : f32 to vector<2x8x8xf32>
    %16 = arith.select %14, %8, %15 : vector<2x8x8xi1>, vector<2x8x8xf32>
    %cst_6 = arith.constant dense<0xFF800000> : vector<2x8xf32>
    %17 = vector.multi_reduction <maximumf>, %16, %cst_6 [2] : vector<2x8x8xf32> to vector<2x8xf32>
    %18 = vector.shape_cast %17 : vector<2x8xf32> to vector<2x8x1xf32>
    %19 = vector.broadcast %18 : vector<2x8x1xf32> to vector<2x8x8xf32>
    %20 = arith.subf %16, %19 : vector<2x8x8xf32>
    %21 = math.exp %20 : vector<2x8x8xf32>
    %cst_7 = arith.constant dense<0.000000e+00> : vector<2x8xf32>
    %22 = vector.multi_reduction <add>, %21, %cst_7 [2] : vector<2x8x8xf32> to vector<2x8xf32>
    %23 = vector.shape_cast %22 : vector<2x8xf32> to vector<2x8x1xf32>
    %24 = tpu.reciprocal %23 {approx = true} : vector<2x8x1xf32> -> vector<2x8x1xf32>
    %25 = vector.broadcast %24 : vector<2x8x1xf32> to vector<2x8x8xf32>
    %26 = arith.mulf %21, %25 : vector<2x8x8xf32>
    "tpu.trace_start"() <{level = 10 : i32, message = "bqk,bkh->bqh"}> : () -> ()
    %cst_8 = arith.constant dense<0.000000e+00> : vector<2x8x8xf32>
    %27 = tpu.matmul %26, %7, %cst_8 {dimension_numbers = #tpu.dot_dimension_numbers<[2], [1], [1], [2], [0, 0, 0, 1, 1, 2], [0], [0]>} : vector<2x8x8xf32>, vector<2x8x8xf32>, vector<2x8x8xf32> -> vector<2x8x8xf32>
    "tpu.trace_stop"() : () -> ()
    %c0_9 = arith.constant 0 : index
    %c0_10 = arith.constant 0 : index
    %c0_11 = arith.constant 0 : index
    %28 = vector.load %arg3[%c0_9, %c0_10, %c0_11] : memref<2x8x8xf32, #tpu.memory_space<vmem>>, vector<2x8x8xf32>
    tpu.vector_store %arg3[%c0_9, %c0_10, %c0_11], %27 {strides = array<i32>} : memref<2x8x8xf32, #tpu.memory_space<vmem>>, vector<2x8x8xf32>,
    return
  }
  func.func @transform_0(%arg0: i32) -> (i32, i32, i32) {
    %c0_i32 = arith.constant 0 : i32
    %c0_i32_0 = arith.constant 0 : i32
    %c0_i32_1 = arith.constant 0 : i32
    return %arg0, %c0_i32, %c0_i32_0 : i32, i32, i32
  }
  func.func @transform_1(%arg0: i32) -> (i32, i32) {
    %c0_i32 = arith.constant 0 : i32
    %c0_i32_0 = arith.constant 0 : i32
    %c0_i32_1 = arith.constant 0 : i32
    return %c0_i32, %c0_i32_0 : i32, i32
  }
  func.func @transform_2(%arg0: i32) -> (i32, i32, i32) {
    %c0_i32 = arith.constant 0 : i32
    %c0_i32_0 = arith.constant 0 : i32
    %c0_i32_1 = arith.constant 0 : i32
    return %arg0, %c0_i32, %c0_i32_0 : i32, i32, i32
  }
}

</mosaic_0001>

<llo_original>
// kernel: tpu_custom_call.1
$region0: #{tpu_custom_call.1}
  #allocation0 [shape = 'u32[]', space=smem, size = 0x4, offset = 0x4, fixed_abs, tag = 'smem constant byte address 0x4 - core index']
  #allocation1 [shape = 'u32[72,128]{1,0:T(1,128)}', space=vmem, size = 0x9000, scoped, tag = 'internal scratch']
  %s0 = inlined_call_operand.vmem [shape: f32[2,8,64], index: 0, kind: input, shape index: {}]
  %s1 = inlined_call_operand.vmem [shape: f32[64,24], index: 1, kind: input, shape index: {}]
  %s2 = inlined_call_operand.hbm [shape: f32[2,8,8], index: 2, kind: output, shape index: {}]
  %s3 = sld [smem:[#allocation0]]
  $region18: #{tpu_custom_call.1} parent=0
    _
  %s5 = ssub.s32 1, %s3
  %s6 = scalar_select 0, %s5, %s3
  $region1: #{tpu_custom_call.1} parent=0
    #allocation2 [shape = 'u8[8192]{0}', space=vmem, size = 0x2000, scoped, tag = 'output window, operand 0, single buffered']
    #allocation3 [shape = 's32[1]{0}', space=sflag, size = 0x4, scoped, tag = 'scoped memory for tpu_custom_call.1']
    %7 = vsyncpa [#allocation3], 0
    // Predicated region
    $region2: #{tpu_custom_call.1} parent=1 // pred_check
      _
    $region3: #{tpu_custom_call.1} parent=1 // pred_check_branch
      %9 = sbr.rel (0) target = $region5
    $region4: #{tpu_custom_call.1} parent=1 // pred_region
      _
    $region5: #{tpu_custom_call.1} parent=1 // pred_fallthru
      _
    // Predicated region
    $region6: #{tpu_custom_call.1} parent=1 // pred_check
      _
    $region7: #{tpu_custom_call.1} parent=1 // pred_check_branch
      %11 = sbr.rel (0) target = $region9
    $region8: #{tpu_custom_call.1} parent=1 // pred_region
      _
    $region9: #{tpu_custom_call.1} parent=1 // pred_fallthru
      _
    %v12 = vld [vmem:[%s0] sm:$0xff]
    %v13 = vld [vmem:[%s0 + $0x8] sm:$0xff]
    %v14 = vld [vmem:[%s1] sm:$0xff]
    %v15 = vld [vmem:[%s1 + $0x8] sm:$0xff]
    %v16 = vld [vmem:[%s1 + $0x10] sm:$0xff]
    %v17 = vld [vmem:[%s1 + $0x18] sm:$0xff]
    %v18 = vld [vmem:[%s1 + $0x20] sm:$0xff]
    %v19 = vld [vmem:[%s1 + $0x28] sm:$0xff]
    %v20 = vld [vmem:[%s1 + $0x30] sm:$0xff]
    %v21 = vld [vmem:[%s1 + $0x38] sm:$0xff]
    %vm22 = vcmask 523264
    %v24 = vsel %vm22, %v12, 0
    %v27 = vsel %vm22, %v13, 0
    %29 = vmatpush.msra.mxu0 0.0
    %30 = vmatpush.msra.mxu0 0.0
    %31 = vmatpush.msra.mxu0 0.0
    %32 = vmatpush.msra.mxu0 0.0
    %33 = vmatpush.msra.mxu0 0.0
    %34 = vmatpush.msra.mxu0 0.0
    %35 = vmatpush.msra.mxu0 0.0
    %36 = vmatpush.msra.mxu0 0.0
    %37 = vmatpush.msra.mxu0 %v21
    %38 = vmatpush.msra.mxu0 %v20
    %39 = vmatpush.msra.mxu0 %v19
    %40 = vmatpush.msra.mxu0 %v18
    %41 = vmatpush.msra.mxu0 %v17
    %42 = vmatpush.msra.mxu0 %v16
    %43 = vmatpush.msra.mxu0 %v15
    %44 = vmatpush.msra.mxu0 %v14
    %45 = vmatmul.f32.gmra.mxu0 %v24
    %v46 = vpop.f32.mrf.mxu0
    %v47 = vadd.f32 0.0, %v46
    %48 = vmatmul.f32.gmra.mxu0 %v27
    %v49 = vpop.f32.mrf.mxu0
    %v50 = vadd.f32 0.0, %v49
    %51 = vdwg.mxu0
    %53 = vrot.lane.b32.xlu0 %v47, 120
    %v54 = vpop.permute.xlu0 %53
    %vm55 = vcmask 64512
    %v56 = vsel %vm55, %v47, 0
    %v58 = vsel %vm55, %v54, 0
    %60 = vmatpush.xpose.msra.mxu0 0.0
    %61 = vmatpush.xpose.msra.mxu0 0.0
    %62 = vmatpush.xpose.msra.mxu0 0.0
    %63 = vmatpush.xpose.msra.mxu0 0.0
    %64 = vmatpush.xpose.msra.mxu0 0.0
    %65 = vmatpush.xpose.msra.mxu0 0.0
    %66 = vmatpush.xpose.msra.mxu0 0.0
    %67 = vmatpush.xpose.msra.mxu0 0.0
    %68 = vmatpush.xpose.msra.mxu0 0.0
    %69 = vmatpush.xpose.msra.mxu0 0.0
    %70 = vmatpush.xpose.msra.mxu0 0.0
    %71 = vmatpush.xpose.msra.mxu0 0.0
    %72 = vmatpush.xpose.msra.mxu0 0.0
    %73 = vmatpush.xpose.msra.mxu0 0.0
    %74 = vmatpush.xpose.msra.mxu0 0.0
    %75 = vmatpush.xpose.msra.mxu0 %v58
    %76 = vmatmul.f32.gmra.mxu0 %v56
    %v77 = vpop.f32.mrf.mxu0
    %v78 = vadd.f32 0.0, %v77
    %79 = vdwg.mxu0
    %81 = vrot.lane.b32.xlu0 %v50, 120
    %v82 = vpop.permute.xlu0 %81
    %v83 = vsel %vm55, %v50, 0
    %v85 = vsel %vm55, %v82, 0
    %87 = vmatpush.xpose.msra.mxu0 0.0
    %88 = vmatpush.xpose.msra.mxu0 0.0
    %89 = vmatpush.xpose.msra.mxu0 0.0
    %90 = vmatpush.xpose.msra.mxu0 0.0
    %91 = vmatpush.xpose.msra.mxu0 0.0
    %92 = vmatpush.xpose.msra.mxu0 0.0
    %93 = vmatpush.xpose.msra.mxu0 0.0
    %94 = vmatpush.xpose.msra.mxu0 0.0
    %95 = vmatpush.xpose.msra.mxu0 0.0
    %96 = vmatpush.xpose.msra.mxu0 0.0
    %97 = vmatpush.xpose.msra.mxu0 0.0
    %98 = vmatpush.xpose.msra.mxu0 0.0
    %99 = vmatpush.xpose.msra.mxu0 0.0
    %100 = vmatpush.xpose.msra.mxu0 0.0
    %101 = vmatpush.xpose.msra.mxu0 0.0
    %102 = vmatpush.xpose.msra.mxu0 %v85
    %103 = vmatmul.f32.gmra.mxu0 %v83
    %v104 = vpop.f32.mrf.mxu0
    %v105 = vadd.f32 0.0, %v104
    %106 = vdwg.mxu0
    %v107 = vlaneseq
    %v108 = vshrl.u32 %v107, 7
    %v109 = vlaneseq
    %v110 = vand.u32 %v109, 127
    %vm111 = vcmp.le.s32.totalorder %v110, %v108
    %v112 = vsel %vm111, 1, 0
    %vm113 = vcmp.eq.s32.totalorder %v112, 1
    %v114 = vsel %vm113, %v78, -1e+30
    %v115 = vsel %vm113, %v105, -1e+30
    %v116 = vsel %vm55, %v114, -inf
    %117 = vmax.xlane.f32.xlu0 %v116
    %v118 = vpop.xlane.xlu0 %117
    %v119 = vsel %vm55, %v115, -inf
    %120 = vmax.xlane.f32.xlu0 %v119
    %v121 = vpop.xlane.xlu0 %120
    %v122 = vsub.f32 %v114, %v118
    %v123 = vsub.f32 %v115, %v121
    %v124 = vmul.f32 %v122, 1.442695
    %v125 = vpow.pop %v124
    %v126 = vmul.f32 %v123, 1.442695
    %v127 = vpow.pop %v126
    %v128 = vsel %vm55, %v125, 0.0
    %129 = vadd.xlane.f32.xlu0 %v128
    %v130 = vpop.xlane.xlu0 %129
    %v131 = vsel %vm55, %v127, 0.0
    %132 = vadd.xlane.f32.xlu0 %v131
    %v133 = vpop.xlane.xlu0 %132
    %v134 = vrcp.pop %v130
    %v135 = vrcp.pop %v133
    %v136 = vmul.f32 %v125, %v134
    %v137 = vmul.f32 %v127, %v135
    %138 = vrot.lane.b32.xlu0 %v47, 112
    %v139 = vpop.permute.xlu0 %138
    %v142 = vsel %vm55, %v136, 0
    %144 = vmatpush.msra.mxu0 0.0
    %145 = vmatpush.msra.mxu0 0.0
    %146 = vmatpush.msra.mxu0 0.0
    %147 = vmatpush.msra.mxu0 0.0
    %148 = vmatpush.msra.mxu0 0.0
    %149 = vmatpush.msra.mxu0 0.0
    %150 = vmatpush.msra.mxu0 0.0
    %151 = vmatpush.msra.mxu0 0.0
    %152 = vmatpush.msra.mxu0 0.0
    %153 = vmatpush.msra.mxu0 0.0
    %154 = vmatpush.msra.mxu0 0.0
    %155 = vmatpush.msra.mxu0 0.0
    %156 = vmatpush.msra.mxu0 0.0
    %157 = vmatpush.msra.mxu0 0.0
    %158 = vmatpush.msra.mxu0 0.0
    %159 = vmatpush.msra.mxu0 %v139
    %160 = vmatmul.f32.gmra.mxu0 %v142
    %v161 = vpop.f32.mrf.mxu0
    %v162 = vadd.f32 0.0, %v161
    %163 = vdwg.mxu0
    %164 = vrot.lane.b32.xlu0 %v50, 112
    %v165 = vpop.permute.xlu0 %164
    %v168 = vsel %vm55, %v137, 0
    %170 = vmatpush.msra.mxu0 0.0
    %171 = vmatpush.msra.mxu0 0.0
    %172 = vmatpush.msra.mxu0 0.0
    %173 = vmatpush.msra.mxu0 0.0
    %174 = vmatpush.msra.mxu0 0.0
    %175 = vmatpush.msra.mxu0 0.0
    %176 = vmatpush.msra.mxu0 0.0
    %177 = vmatpush.msra.mxu0 0.0
    %178 = vmatpush.msra.mxu0 0.0
    %179 = vmatpush.msra.mxu0 0.0
    %180 = vmatpush.msra.mxu0 0.0
    %181 = vmatpush.msra.mxu0 0.0
    %182 = vmatpush.msra.mxu0 0.0
    %183 = vmatpush.msra.mxu0 0.0
    %184 = vmatpush.msra.mxu0 0.0
    %185 = vmatpush.msra.mxu0 %v165
    %186 = vmatmul.f32.gmra.mxu0 %v168
    %v187 = vpop.f32.mrf.mxu0
    %v188 = vadd.f32 0.0, %v187
    %189 = vdwg.mxu0
    %190 = vst.msk [vmem:[#allocation2] sm:$0xff] %vm55, %v162
    %191 = vst.msk [vmem:[#allocation2 + $0x8] sm:$0xff] %vm55, %v188
    // Predicated region
    $region10: #{tpu_custom_call.1} parent=1 // pred_check
      _
    $region11: #{tpu_custom_call.1} parent=1 // pred_check_branch
      %193 = sbr.rel (0) target = $region13
    $region12: #{tpu_custom_call.1} parent=1 // pred_region
      %195 = vsyncadd [#allocation3], 0
      %s196 = sshll.u32 [#allocation2], 4
      %s197 = int_to_ptr.vmem [resolvable:$true] %s196
      %s198 = sshll.u32 %s2, 4
      %s199 = int_to_ptr.hbm [resolvable:$true] %s198
      %204 = dma.vmem_to_hbm [thread:$0]  %s197, 256, %s199, [#allocation3], 128, 128, 8
    $region13: #{tpu_custom_call.1} parent=1 // pred_fallthru
      _
    // Predicated region
    $region14: #{tpu_custom_call.1} parent=1 // pred_check
      _
    $region15: #{tpu_custom_call.1} parent=1 // pred_check_branch
      %206 = sbr.rel (0) target = $region17
    $region16: #{tpu_custom_call.1} parent=1 // pred_region
      %208 = dma.done [#allocation3], 256
    $region17: #{tpu_custom_call.1} parent=1 // pred_fallthru
      _
    %209 = vsyncpa [#allocation3], 1

</llo_original>
